<compile_context>
chip_gen: v5e
topology: v5e:2x2
jax: 0.10.0
libtpu: 0.0.40
codegen_flags: <defaults>
</compile_context>

<pallas_src>
import functools

import jax
import jax.numpy as jnp
from jax import lax
from jax.experimental import pallas as pl
from jax.experimental.pallas import tpu as pltpu


def _round_up(n: int, m: int) -> int:
    return ((n + m - 1) // m) * m


def mlp_kernel(x_ref, w_ref, b_ref, out_ref, *, dims, offs, sub):
    """x_ref: [TB, S] f32 activations.  w_ref: packed bf16 weight slab.
    b_ref: [4, wmax] f32 bias slab (row L = layer L's bias).

    Weight slab layout: layer L's [fin, fout] weight occupies rows
    [offs[L] : offs[L]+fin], cols [:fout]; each block is padded to a multiple
    of 16 rows so static slices stay bf16-sublane-tile aligned.
    """
    S, H, A = dims
    o1, o2, o3, o4 = offs
    TB = x_ref.shape[0]

    # Sub-block the tile so EUP (tanh/sigmoid) of block i overlaps MXU of i+1.
    if sub >= TB or TB % sub != 0:
        n_sub, SUB = 1, TB
    else:
        n_sub, SUB = TB // sub, sub

    # Loop-invariant weight loads (bf16) — hoisted out of the sub-block loop.
    w1 = w_ref[o1:o1 + S, :H]
    w2 = w_ref[o2:o2 + H, :H]
    w3 = w_ref[o3:o3 + H, :H]
    w4 = w_ref[o4:o4 + H, :A]
    # Biases stay f32; pre-broadcast once (JAX does not CSE broadcast_in_dim).
    b1 = jnp.broadcast_to(b_ref[0:1, :H], (SUB, H))
    b2 = jnp.broadcast_to(b_ref[1:2, :H], (SUB, H))
    b3 = jnp.broadcast_to(b_ref[2:3, :H], (SUB, H))
    b4 = jnp.broadcast_to(b_ref[3:4, :A], (SUB, A))

    def run_block(x):
        # bf16 MXU operands, f32 accumulation; bias-add / tanh / sigmoid in f32.
        h = jnp.tanh(jnp.dot(x.astype(jnp.bfloat16), w1,
                             preferred_element_type=jnp.float32) + b1)
        h = jnp.tanh(jnp.dot(h.astype(jnp.bfloat16), w2,
                             preferred_element_type=jnp.float32) + b2)
        h = jnp.tanh(jnp.dot(h.astype(jnp.bfloat16), w3,
                             preferred_element_type=jnp.float32) + b3)
        y = jax.nn.sigmoid(jnp.dot(h.astype(jnp.bfloat16), w4,
                                   preferred_element_type=jnp.float32) + b4)
        # A=4 lanes -> masked store; accepted (output traffic is negligible here).
        return y.astype(out_ref.dtype)

    if n_sub == 1:
        out_ref[...] = run_block(x_ref[...])
    else:
        def body(i, carry):
            r = pl.multiple_of(i * SUB, SUB)
            out_ref[pl.ds(r, SUB), :] = run_block(x_ref[pl.ds(r, SUB), :])
            return carry
        lax.fori_loop(0, n_sub, body, 0, unroll=True)


def pack_params(params):
    """Pack weights into one bf16 slab and biases into one small f32 slab.

    Returns (wslab_bf16, bslab_f32, row_offsets, (S, H, A)).  Offsets/dims are
    static Python ints.  Call ONCE and reuse (do not re-pack per forward).
    """
    layers = [("w1", "b1"), ("w2", "b2"), ("w3", "b3"), ("w4", "b4")]
    S = params["w1"].shape[0]
    H = params["w2"].shape[0]
    A = params["w4"].shape[1]
    wmax = max(params[w].shape[1] for w, _ in layers)

    blocks, offs, row = [], [], 0
    for wname, _ in layers:
        w = params[wname].astype(jnp.bfloat16)
        fin, fout = w.shape
        rows = _round_up(fin, 16)          # bf16 packs 16 rows per sublane tile
        blk = jnp.zeros((rows, wmax), jnp.bfloat16).at[:fin, :fout].set(w)
        blocks.append(blk)
        offs.append(row)
        row += rows
    wslab = jnp.concatenate(blocks, axis=0)

    bslab = jnp.zeros((len(layers), wmax), jnp.float32)
    for i, (_, bname) in enumerate(layers):
        b = params[bname].astype(jnp.float32)
        bslab = bslab.at[i, :b.shape[0]].set(b)
    return wslab, bslab, tuple(offs), (S, H, A)


def _net_forward(x, *, wslab, bslab, offs, dims, batch_tile, sub_rows):
    """Forward pass of Net.  x: [B, state_size] (or [state_size]) float32."""
    S, H, A = dims
    x2 = x.reshape(-1, S).astype(jnp.float32)
    B = x2.shape[0]

    kernel = functools.partial(mlp_kernel, dims=dims, offs=offs, sub=sub_rows)

    if B >= 2 * batch_tile:
        # Batch-tiled path: activations stream; weight/bias slabs have constant
        # index_maps so they are DMA'd once and stay VMEM-resident across steps.
        nb = pl.cdiv(B, batch_tile)
        if nb % 2:
            nb += 1                        # even tile count -> balances 2 TCs on v7x
        TB = _round_up(pl.cdiv(B, nb), sub_rows)   # multiple of sub-block size
        nb = pl.cdiv(B, TB)
        # Grid over-covers B; Pallas masks the ragged last tile's reads/writes,
        # so no full-batch jnp.pad / extra HBM round-trip is needed.
        out = pl.pallas_call(
            kernel,
            out_shape=jax.ShapeDtypeStruct((B, A), jnp.float32),
            grid=(nb,),
            in_specs=[
                pl.BlockSpec((TB, S), lambda i: (i, 0)),      # activations stream
                pl.BlockSpec(wslab.shape, lambda i: (0, 0)),  # weights resident
                pl.BlockSpec(bslab.shape, lambda i: (0, 0)),  # biases resident
            ],
            out_specs=pl.BlockSpec((TB, A), lambda i: (i, 0)),
            compiler_params=pltpu.CompilerParams(
                dimension_semantics=("parallel",)),
        )(x2, wslab, bslab)
    else:
        # Small batch: gridless single-shot call, whole arrays in VMEM
        # (3 small DMAs total: activations + weight slab + bias slab).
        out = pl.pallas_call(
            kernel,
            out_shape=jax.ShapeDtypeStruct((B, A), jnp.float32),
            in_specs=[pl.BlockSpec(memory_space=pltpu.MemorySpace.VMEM)] * 3,
            out_specs=pl.BlockSpec(memory_space=pltpu.MemorySpace.VMEM),
        )(x2, wslab, bslab)

    # torch: action.squeeze() -- drop all size-1 dims
    return jnp.squeeze(out)


def make_net_forward(params, *, batch_tile=2048, sub_rows=256):
    """Pack parameters ONCE and return a jitted forward(x) closure."""
    wslab, bslab, offs, dims = pack_params(params)
    fwd = functools.partial(_net_forward, wslab=wslab, bslab=bslab,
                            offs=offs, dims=dims,
                            batch_tile=batch_tile, sub_rows=sub_rows)
    return jax.jit(fwd)


def init_params(key, state_size, action_size, hidden_units):
    """Mirrors Net.reset_parameters(): weights ~ N(0, 0.1); biases keep the
    default nn.Linear init U(-1/sqrt(fan_in), +1/sqrt(fan_in))."""
    keys = jax.random.split(key, 8)

    def linear(kw, kb, fan_in, fan_out):
        # weight stored pre-transposed: [in, out]
        w = 0.1 * jax.random.normal(kw, (fan_in, fan_out), dtype=jnp.float32)
        bound = 1.0 / jnp.sqrt(float(fan_in))
        b = jax.random.uniform(kb, (fan_out,), minval=-bound, maxval=bound,
                               dtype=jnp.float32)
        return w, b

    w1, b1 = linear(keys[0], keys[1], state_size, hidden_units)
    w2, b2 = linear(keys[2], keys[3], hidden_units, hidden_units)
    w3, b3 = linear(keys[4], keys[5], hidden_units, hidden_units)
    w4, b4 = linear(keys[6], keys[7], hidden_units, action_size)
    return {"w1": w1, "b1": b1, "w2": w2, "b2": b2,
            "w3": w3, "b3": b3, "w4": w4, "b4": b4}


def net_forward_ref_f32(x, p):
    h = jnp.tanh(x @ p["w1"] + p["b1"])
    h = jnp.tanh(h @ p["w2"] + p["b2"])
    h = jnp.tanh(h @ p["w3"] + p["b3"])
    return jnp.squeeze(jax.nn.sigmoid(h @ p["w4"] + p["b4"]))


def net_forward_ref_bf16(x, p):
    """Reference mirroring the kernel numerics (bf16 operands, f32 accum)."""
    def lin(h, w, b):
        return jnp.dot(h.astype(jnp.bfloat16), w.astype(jnp.bfloat16),
                       preferred_element_type=jnp.float32) + b
    h = jnp.tanh(lin(x, p["w1"], p["b1"]))
    h = jnp.tanh(lin(h, p["w2"], p["b2"]))
    h = jnp.tanh(lin(h, p["w3"], p["b3"]))
    return jnp.squeeze(jax.nn.sigmoid(lin(h, p["w4"], p["b4"])))


if __name__ == "__main__":
    state_size, action_size, hidden_units = 16, 4, 32

    key = jax.random.PRNGKey(0)
    k_xs, k_x1, k_xb, k_p = jax.random.split(key, 4)
    params = init_params(k_p, state_size, action_size, hidden_units)

    forward = make_net_forward(params, batch_tile=2048, sub_rows=256)

    # 1) Small batch -> gridless single-shot path.
    x_small = jax.random.normal(k_xs, (8, state_size), dtype=jnp.float32)
    out_small = jax.block_until_ready(forward(x_small))
    assert out_small.shape == (8, action_size)
    assert jnp.allclose(out_small, net_forward_ref_bf16(x_small, params), atol=2e-3)
    assert jnp.allclose(out_small, net_forward_ref_f32(x_small, params), atol=3e-2)

    # 2) Single sample -> squeeze() drops the batch dim like torch.
    x_one = jax.random.normal(k_x1, (state_size,), dtype=jnp.float32)
    out_one = jax.block_until_ready(forward(x_one))
    assert out_one.shape == (action_size,)
    assert jnp.allclose(out_one, net_forward_ref_bf16(x_one, params), atol=2e-3)

    # 3) Large ragged batch -> batch-tiled path: even tile count (v7x balance),
    #    VMEM-resident weights, sub-block interleave, masked ragged tail.
    x_big = jax.random.normal(k_xb, (4100, state_size), dtype=jnp.float32)
    out_big = jax.block_until_ready(forward(x_big))
    assert out_big.shape == (4100, action_size)
    assert jnp.allclose(out_big, net_forward_ref_bf16(x_big, params), atol=2e-3)
    assert jnp.allclose(out_big, net_forward_ref_f32(x_big, params), atol=3e-2)

    print("KERNEL_OK")
</pallas_src>

<mosaic_0001>
module attributes {stable_mosaic.version = 11 : i64} {
  func.func @mlp_kernel(%arg0: memref<8x16xf32, #tpu.memory_space<vmem>>, %arg1: memref<112x32xbf16, #tpu.memory_space<vmem>>, %arg2: memref<4x32xf32, #tpu.memory_space<vmem>>, %arg3: memref<8x4xf32, #tpu.memory_space<vmem>>) attributes {dimension_semantics = [], scalar_prefetch = 0 : i64, scratch_operands = 0 : i64, tpu.core_type = #tpu.core_type<tc>} {
    %c0 = arith.constant 0 : index
    %c0_0 = arith.constant 0 : index
    %0 = vector.load %arg1[%c0, %c0_0] : memref<112x32xbf16, #tpu.memory_space<vmem>>, vector<16x32xbf16>
    %c16 = arith.constant 16 : index
    %c0_1 = arith.constant 0 : index
    %1 = vector.load %arg1[%c16, %c0_1] : memref<112x32xbf16, #tpu.memory_space<vmem>>, vector<32x32xbf16>
    %c48 = arith.constant 48 : index
    %c0_2 = arith.constant 0 : index
    %2 = vector.load %arg1[%c48, %c0_2] : memref<112x32xbf16, #tpu.memory_space<vmem>>, vector<32x32xbf16>
    %c80 = arith.constant 80 : index
    %c0_3 = arith.constant 0 : index
    %3 = vector.load %arg1[%c80, %c0_3] : memref<112x32xbf16, #tpu.memory_space<vmem>>, vector<32x4xbf16>
    %c0_4 = arith.constant 0 : index
    %c0_5 = arith.constant 0 : index
    %4 = vector.load %arg2[%c0_4, %c0_5] : memref<4x32xf32, #tpu.memory_space<vmem>>, vector<1x32xf32>
    %5 = vector.shape_cast %4 : vector<1x32xf32> to vector<1x32xf32>
    %6 = vector.broadcast %5 : vector<1x32xf32> to vector<8x32xf32>
    %c1 = arith.constant 1 : index
    %c0_6 = arith.constant 0 : index
    %7 = vector.load %arg2[%c1, %c0_6] : memref<4x32xf32, #tpu.memory_space<vmem>>, vector<1x32xf32>
    %8 = vector.shape_cast %7 : vector<1x32xf32> to vector<1x32xf32>
    %9 = vector.broadcast %8 : vector<1x32xf32> to vector<8x32xf32>
    %c2 = arith.constant 2 : index
    %c0_7 = arith.constant 0 : index
    %10 = vector.load %arg2[%c2, %c0_7] : memref<4x32xf32, #tpu.memory_space<vmem>>, vector<1x32xf32>
    %11 = vector.shape_cast %10 : vector<1x32xf32> to vector<1x32xf32>
    %12 = vector.broadcast %11 : vector<1x32xf32> to vector<8x32xf32>
    %c3 = arith.constant 3 : index
    %c0_8 = arith.constant 0 : index
    %13 = vector.load %arg2[%c3, %c0_8] : memref<4x32xf32, #tpu.memory_space<vmem>>, vector<1x4xf32>
    %14 = vector.shape_cast %13 : vector<1x4xf32> to vector<1x4xf32>
    %15 = vector.broadcast %14 : vector<1x4xf32> to vector<8x4xf32>
    %c0_9 = arith.constant 0 : index
    %c0_10 = arith.constant 0 : index
    %16 = vector.load %arg0[%c0_9, %c0_10] : memref<8x16xf32, #tpu.memory_space<vmem>>, vector<8x16xf32>
    %17 = arith.truncf %16 : vector<8x16xf32> to vector<8x16xbf16>
    %cst = arith.constant dense<0.000000e+00> : vector<8x32xf32>
    %18 = tpu.matmul %17, %0, %cst {dimension_numbers = #tpu.dot_dimension_numbers<[1], [0], [0], [1], [0, 0, 1, 1], [], []>} : vector<8x16xbf16>, vector<16x32xbf16>, vector<8x32xf32> -> vector<8x32xf32>
    %19 = arith.addf %18, %6 : vector<8x32xf32>
    %20 = math.tanh %19 : vector<8x32xf32>
    %21 = arith.truncf %20 : vector<8x32xf32> to vector<8x32xbf16>
    %cst_11 = arith.constant dense<0.000000e+00> : vector<8x32xf32>
    %22 = tpu.matmul %21, %1, %cst_11 {dimension_numbers = #tpu.dot_dimension_numbers<[1], [0], [0], [1], [0, 0, 1, 1], [], []>} : vector<8x32xbf16>, vector<32x32xbf16>, vector<8x32xf32> -> vector<8x32xf32>
    %23 = arith.addf %22, %9 : vector<8x32xf32>
    %24 = math.tanh %23 : vector<8x32xf32>
    %25 = arith.truncf %24 : vector<8x32xf32> to vector<8x32xbf16>
    %cst_12 = arith.constant dense<0.000000e+00> : vector<8x32xf32>
    %26 = tpu.matmul %25, %2, %cst_12 {dimension_numbers = #tpu.dot_dimension_numbers<[1], [0], [0], [1], [0, 0, 1, 1], [], []>} : vector<8x32xbf16>, vector<32x32xbf16>, vector<8x32xf32> -> vector<8x32xf32>
    %27 = arith.addf %26, %12 : vector<8x32xf32>
    %28 = math.tanh %27 : vector<8x32xf32>
    %29 = arith.truncf %28 : vector<8x32xf32> to vector<8x32xbf16>
    %cst_13 = arith.constant dense<0.000000e+00> : vector<8x4xf32>
    %30 = tpu.matmul %29, %3, %cst_13 {dimension_numbers = #tpu.dot_dimension_numbers<[1], [0], [0], [1], [0, 0, 1, 1], [], []>} : vector<8x32xbf16>, vector<32x4xbf16>, vector<8x4xf32> -> vector<8x4xf32>
    %31 = arith.addf %30, %15 : vector<8x4xf32>
    %32 = arith.negf %31 : vector<8x4xf32>
    %33 = math.exp %32 : vector<8x4xf32>
    %cst_14 = arith.constant 1.000000e+00 : f32
    %34 = vector.broadcast %cst_14 : f32 to vector<8x4xf32>
    %35 = arith.addf %34, %33 : vector<8x4xf32>
    %36 = arith.divf %34, %35 : vector<8x4xf32>
    %c0_15 = arith.constant 0 : index
    %c0_16 = arith.constant 0 : index
    %37 = vector.load %arg3[%c0_15, %c0_16] : memref<8x4xf32, #tpu.memory_space<vmem>>, vector<8x4xf32>
    tpu.vector_store %arg3[%c0_15, %c0_16], %36 {strides = array<i32>} : memref<8x4xf32, #tpu.memory_space<vmem>>, vector<8x4xf32>,
    return
  }
}

</mosaic_0001>

<llo_original>
// kernel: _net_forward.1
$region0: #{_net_forward.1}
  #allocation0 [shape = 'u32[]', space=smem, size = 0x4, offset = 0x4, fixed_abs, tag = 'smem constant byte address 0x4 - core index']
  #allocation1 [shape = 'u32[72,128]{1,0:T(1,128)}', space=vmem, size = 0x9000, scoped, tag = 'internal scratch']
  %s0 = inlined_call_operand.hbm [shape: f32[8,16], index: 0, kind: input, shape index: {}]
  %s1 = inlined_call_operand.hbm [shape: bf16[112,32], index: 1, kind: input, shape index: {}]
  %s2 = inlined_call_operand.hbm [shape: f32[4,32], index: 2, kind: input, shape index: {}]
  %s3 = inlined_call_operand.vmem [shape: f32[8,4], index: 3, kind: output, shape index: {}]
  %s4 = sld [smem:[#allocation0]]
  $region34: #{_net_forward.1} parent=0
    _
  %s6 = ssub.s32 1, %s4
  %s7 = scalar_select 0, %s6, %s4
  $region1: #{_net_forward.1} parent=0
    #allocation2 [shape = 'u8[4096]{0}', space=vmem, size = 0x1000, scoped, tag = 'input window, operand 0, single buffered']
    #allocation3 [shape = 's32[1]{0}', space=sflag, size = 0x4, scoped, tag = 'scoped memory for _net_forward.1']
    #allocation4 [shape = 'u8[28672]{0}', space=vmem, size = 0x7000, scoped, tag = 'input window, operand 1, single buffered']
    #allocation5 [shape = 's32[1]{0}', space=sflag, size = 0x4, scoped, tag = 'scoped memory for _net_forward.1']
    #allocation6 [shape = 'u8[2048]{0}', space=vmem, size = 0x800, scoped, tag = 'input window, operand 2, single buffered']
    %8 = vsyncpa [#allocation3], 0
    %9 = vsyncpa [#allocation5], 0
    // Predicated region
    $region2: #{_net_forward.1} parent=1 // pred_check
      _
    $region3: #{_net_forward.1} parent=1 // pred_check_branch
      %11 = sbr.rel (0) target = $region5
    $region4: #{_net_forward.1} parent=1 // pred_region
      %13 = vsyncadd [#allocation3], 0
      %s15 = sshll.u32 %s0, 4
      %s16 = int_to_ptr.hbm [resolvable:$true] %s15
      %s17 = sshll.u32 [#allocation2], 4
      %s18 = int_to_ptr.vmem [resolvable:$true] %s17
      %20 = dma.hbm_to_vmem [thread:$0]  %s16, 128, %s18, [#allocation3]
    $region5: #{_net_forward.1} parent=1 // pred_fallthru
      _
    // Predicated region
    $region6: #{_net_forward.1} parent=1 // pred_check
      _
    $region7: #{_net_forward.1} parent=1 // pred_check_branch
      %22 = sbr.rel (0) target = $region9
    $region8: #{_net_forward.1} parent=1 // pred_region
      %24 = vsyncadd [#allocation5], 0
      %s25 = sshll.u32 %s1, 4
      %s26 = int_to_ptr.hbm [resolvable:$true] %s25
      %s27 = sshll.u32 [#allocation4], 4
      %s28 = int_to_ptr.vmem [resolvable:$true] %s27
      %33 = dma.hbm_to_vmem [thread:$0]  %s26, 896, %s28, [#allocation5], 64, 64, 4
    $region9: #{_net_forward.1} parent=1 // pred_fallthru
      _
    // Predicated region
    $region10: #{_net_forward.1} parent=1 // pred_check
      _
    $region11: #{_net_forward.1} parent=1 // pred_check_branch
      %35 = sbr.rel (0) target = $region13
    $region12: #{_net_forward.1} parent=1 // pred_region
      %37 = vsyncadd [#allocation5], 0
      %s39 = sshll.u32 %s2, 4
      %s40 = int_to_ptr.hbm [resolvable:$true] %s39
      %s41 = sshll.u32 [#allocation6], 4
      %s42 = int_to_ptr.vmem [resolvable:$true] %s41
      %44 = dma.hbm_to_vmem [thread:$0]  %s40, 64, %s42, [#allocation5]
    $region13: #{_net_forward.1} parent=1 // pred_fallthru
      _
    // Predicated region
    $region14: #{_net_forward.1} parent=1 // pred_check
      _
    $region15: #{_net_forward.1} parent=1 // pred_check_branch
      %46 = sbr.rel (0) target = $region17
    $region16: #{_net_forward.1} parent=1 // pred_region
      %48 = dma.done [#allocation3], 128
    $region17: #{_net_forward.1} parent=1 // pred_fallthru
      _
    // Predicated region
    $region18: #{_net_forward.1} parent=1 // pred_check
      _
    $region19: #{_net_forward.1} parent=1 // pred_check_branch
      %50 = sbr.rel (0) target = $region21
    $region20: #{_net_forward.1} parent=1 // pred_region
      %52 = dma.done [#allocation5], 896
    $region21: #{_net_forward.1} parent=1 // pred_fallthru
      _
    // Predicated region
    $region22: #{_net_forward.1} parent=1 // pred_check
      _
    $region23: #{_net_forward.1} parent=1 // pred_check_branch
      %54 = sbr.rel (0) target = $region25
    $region24: #{_net_forward.1} parent=1 // pred_region
      %56 = dma.done [#allocation5], 64
    $region25: #{_net_forward.1} parent=1 // pred_fallthru
      _
    %v58 = vld [vmem:[#allocation4] sm:$0xf]
    %v59 = vld [vmem:[#allocation4 + $0x4] sm:$0xf]
    %v60 = vld [vmem:[#allocation4 + $0x8] sm:$0xf]
    %v61 = vld [vmem:[#allocation4 + $0xc] sm:$0xf]
    %v62 = vld [vmem:[#allocation4 + $0x10] sm:$0xf]
    %v63 = vld [vmem:[#allocation4 + $0x14] sm:$0xf]
    %v64 = vld [vmem:[#allocation4 + $0x18] sm:$0xf]
    %v65 = vld [vmem:[#allocation4 + $0x1c] sm:$0xf]
    %v66 = vld [vmem:[#allocation4 + $0x20] sm:$0xf]
    %v67 = vld [vmem:[#allocation4 + $0x24] sm:$0xf]
    %v68 = vld [vmem:[#allocation4 + $0x28] sm:$0xf]
    %v69 = vld [vmem:[#allocation4 + $0x2c] sm:$0xf]
    %v70 = vld [vmem:[#allocation4 + $0x30] sm:$0xf]
    %v71 = vld [vmem:[#allocation4 + $0x34] sm:$0xf]
    %v72 = vld [vmem:[#allocation6] sm:$0x1]
    %v73 = vperm.slane %v72, 0
    %v74 = vld [vmem:[#allocation6 + $0x1] sm:$0x1]
    %v75 = vperm.slane %v74, 0
    %v76 = vld [vmem:[#allocation6 + $0x2] sm:$0x1]
    %v77 = vperm.slane %v76, 0
    %v78 = vld [vmem:[#allocation6 + $0x3] sm:$0x1]
    %v79 = vperm.slane %v78, 0
    %v80 = vld [vmem:[#allocation2] sm:$0xff]
    %v81 = vpack.c.bf16 %v80, %v80
    %v84 = vunpack.c.l.b16 %v58
    %v85 = vunpack.c.l.b16 %v59
    %v86 = vpack.c.b16 %v85, %v84
    %vm88 = vcmask 130048
    %v90 = vsel %vm88, %v81, 0
    %92 = vmatpush.bf16.msra.mxu0 0
    %93 = vmatpush.bf16.msra.mxu0 0
    %94 = vmatpush.bf16.msra.mxu0 0
    %95 = vmatpush.bf16.msra.mxu0 0
    %96 = vmatpush.bf16.msra.mxu0 0
    %97 = vmatpush.bf16.msra.mxu0 0
    %98 = vmatpush.bf16.msra.mxu0 0
    %99 = vmatpush.bf16.msra.mxu0 %v86
    %100 = vmatmul.bf16.gmra.mxu0 %v90
    %v101 = vpop.f32.mrf.mxu0
    %v102 = vadd.f32 %v73, %v101
    %v103 = vpop.f32.mrf.mxu0
    %104 = vdwg.mxu0
    %v105 = vtanh.pop %v102
    %v106 = vpack.c.bf16 %v105, %v105
    %v111 = vunpack.c.l.b16 %v60
    %v112 = vunpack.c.l.b16 %v61
    %v113 = vunpack.c.l.b16 %v62
    %v114 = vunpack.c.l.b16 %v63
    %v115 = vpack.c.b16 %v112, %v111
    %v116 = vpack.c.b16 %v114, %v113
    %vm119 = vcmask 261120
    %v121 = vsel %vm119, %v106, 0
    %123 = vmatpush.bf16.msra.mxu0 0
    %124 = vmatpush.bf16.msra.mxu0 0
    %125 = vmatpush.bf16.msra.mxu0 0
    %126 = vmatpush.bf16.msra.mxu0 0
    %127 = vmatpush.bf16.msra.mxu0 0
    %128 = vmatpush.bf16.msra.mxu0 0
    %129 = vmatpush.bf16.msra.mxu0 %v116
    %130 = vmatpush.bf16.msra.mxu0 %v115
    %131 = vmatmul.bf16.gmra.mxu0 %v121
    %v132 = vpop.f32.mrf.mxu0
    %v133 = vadd.f32 %v75, %v132
    %v134 = vpop.f32.mrf.mxu0
    %135 = vdwg.mxu0
    %v136 = vtanh.pop %v133
    %v137 = vpack.c.bf16 %v136, %v136
    %v142 = vunpack.c.l.b16 %v64
    %v143 = vunpack.c.l.b16 %v65
    %v144 = vunpack.c.l.b16 %v66
    %v145 = vunpack.c.l.b16 %v67
    %v146 = vpack.c.b16 %v143, %v142
    %v147 = vpack.c.b16 %v145, %v144
    %v151 = vsel %vm119, %v137, 0
    %153 = vmatpush.bf16.msra.mxu0 0
    %154 = vmatpush.bf16.msra.mxu0 0
    %155 = vmatpush.bf16.msra.mxu0 0
    %156 = vmatpush.bf16.msra.mxu0 0
    %157 = vmatpush.bf16.msra.mxu0 0
    %158 = vmatpush.bf16.msra.mxu0 0
    %159 = vmatpush.bf16.msra.mxu0 %v147
    %160 = vmatpush.bf16.msra.mxu0 %v146
    %161 = vmatmul.bf16.gmra.mxu0 %v151
    %v162 = vpop.f32.mrf.mxu0
    %v163 = vadd.f32 %v77, %v162
    %v164 = vpop.f32.mrf.mxu0
    %165 = vdwg.mxu0
    %v166 = vtanh.pop %v163
    %v167 = vpack.c.bf16 %v166, %v166
    %v172 = vunpack.c.l.b16 %v68
    %v173 = vunpack.c.l.b16 %v69
    %v174 = vunpack.c.l.b16 %v70
    %v175 = vunpack.c.l.b16 %v71
    %v176 = vpack.c.b16 %v173, %v172
    %v177 = vpack.c.b16 %v175, %v174
    %v181 = vsel %vm119, %v167, 0
    %183 = vmatpush.bf16.msra.mxu0 0
    %184 = vmatpush.bf16.msra.mxu0 0
    %185 = vmatpush.bf16.msra.mxu0 0
    %186 = vmatpush.bf16.msra.mxu0 0
    %187 = vmatpush.bf16.msra.mxu0 0
    %188 = vmatpush.bf16.msra.mxu0 0
    %189 = vmatpush.bf16.msra.mxu0 %v177
    %190 = vmatpush.bf16.msra.mxu0 %v176
    %191 = vmatmul.bf16.gmra.mxu0 %v181
    %v192 = vpop.f32.mrf.mxu0
    %v193 = vadd.f32 %v79, %v192
    %v194 = vpop.f32.mrf.mxu0
    %195 = vdwg.mxu0
    %v196 = vxor.u32 %v193, 2147483648
    %v197 = vmul.f32 %v196, 1.442695
    %v198 = vpow.pop %v197
    %v199 = vadd.f32 %v198, 1.0
    %v200 = vrcp.pop %v199
    %v201 = vmul.f32 %v199, %v200
    %v202 = vsub.f32 1.0, %v201
    %v203 = vmul.f32 %v200, %v202
    %v204 = vadd.f32 %v200, %v203
    %vm205 = vweird.f32 %v199
    %vm206 = vweird.f32 %v200
    %vm207 = vmor %vm205, %vm206
    %v208 = vsel %vm207, %v200, %v204
    %v209 = vand.u32 2147483647, %v199
    %vm210 = vcmp.eq.f32.partialorder %v209, 8.507059e+37
    %v211 = vand.u32 %v199, 2147483648
    %v212 = vor.u32 1.1754944e-38, %v211
    %v213 = vsel %vm210, %v212, %v208
    %v214 = vmul.f32 1.0, %v213
    %vm215 = vcmask 31744
    %216 = vst.msk [vmem:[%s3] sm:$0xff] %vm215, %v214
    // Predicated region
    $region26: #{_net_forward.1} parent=1 // pred_check
      _
    $region27: #{_net_forward.1} parent=1 // pred_check_branch
      %218 = sbr.rel (0) target = $region29
    $region28: #{_net_forward.1} parent=1 // pred_region
      _
    $region29: #{_net_forward.1} parent=1 // pred_fallthru
      _
    // Predicated region
    $region30: #{_net_forward.1} parent=1 // pred_check
      _
    $region31: #{_net_forward.1} parent=1 // pred_check_branch
      %220 = sbr.rel (0) target = $region33
    $region32: #{_net_forward.1} parent=1 // pred_region
      _
    $region33: #{_net_forward.1} parent=1 // pred_fallthru
      _
    %221 = vsyncpa [#allocation3], 1
    %222 = vsyncpa [#allocation5], 1

</llo_original>
